<compile_context>
chip_gen: v6e
topology: v6e:2x2x1
jax: 0.10.0
libtpu: 0.0.40
codegen_flags: <defaults>
</compile_context>

<pallas_src>
import functools

import jax
import jax.numpy as jnp
from jax.experimental import pallas as pl
from jax.experimental.pallas import tpu as pltpu

_LANE = 128
_TARGET_BLOCK_BYTES = 4 << 20   # per-input bytes per grid step (sweepable)
_VMEM_LIMIT_BYTES = 32 << 20    # safe on v5e/v6e (128 MiB) and v7x (64 MiB)


def _dice_partial_kernel(x_ref, t_ref, out_ref, inter_acc, sum_acc,
                         *, tile_hw, hw, n_hw, needs_mask):
    # x_ref/t_ref: (ROWS, TILE_HW) tile, ROWS = N*C rows packed on sublanes.
    # out_ref:     (1, ROWS, 2) per-parallel-chunk partial [sum(x*t), sum(x+t)].
    # inter_acc/sum_acc: (ROWS, 1) f32 running sums across the HW grid axis.
    p = pl.program_id(0)
    h = pl.program_id(1)

    @pl.when(h == 0)
    def _():
        inter_acc[...] = jnp.zeros_like(inter_acc)
        sum_acc[...] = jnp.zeros_like(sum_acc)

    x = x_ref[...].astype(jnp.float32)
    t = t_ref[...].astype(jnp.float32)

    if needs_mask:
        # Tail tiles (and fully out-of-range tiles whose index_map was clamped)
        # are masked here: Pallas OOB block contents are undefined, not zero.
        start = (p * n_hw + h) * tile_hw
        lane = jax.lax.broadcasted_iota(jnp.int32, x.shape, 1)
        valid = (start + lane) < hw
        x = jnp.where(valid, x, 0.0)
        t = jnp.where(valid, t, 0.0)

    # Two reductions instead of three: sum(x) + sum(t) == sum(x + t).
    inter_acc[...] += jnp.sum(x * t, axis=1, keepdims=True)
    sum_acc[...] += jnp.sum(x + t, axis=1, keepdims=True)

    @pl.when(h == pl.num_programs(1) - 1)
    def _():
        out_ref[0, :, 0:1] = inter_acc[...]
        out_ref[0, :, 1:2] = sum_acc[...]


def multiclass_dice_loss(inputs, targets, weights,
                         target_block_bytes=_TARGET_BLOCK_BYTES):
    """inputs/targets: (N, C, H, W); weights: (C,). Returns scalar loss."""
    N, C, H, W = inputs.shape
    rows, hw = N * C, H * W

    # Free contiguous views (no transpose, no pad, no dtype cast): row r = n*C + c.
    x = inputs.reshape(rows, hw)
    t = targets.reshape(rows, hw)

    # --- Tile the HW (lane) axis into multi-MiB blocks.
    itemsize = max(jnp.dtype(x.dtype).itemsize, jnp.dtype(t.dtype).itemsize)
    max_tile = max(_LANE, (target_block_bytes // (rows * itemsize)) // _LANE * _LANE)
    if hw <= max_tile:
        tile_hw, n_tiles = hw, 1          # single full-extent tile, no masking
    else:
        tile_hw = max_tile                # multiple of 128
        n_tiles = pl.cdiv(hw, tile_hw)

    n_par = 2 if n_tiles >= 2 else 1      # parallel HW split: keeps both v7x TCs busy
    n_hw = pl.cdiv(n_tiles, n_par)
    needs_mask = (n_par * n_hw * tile_hw) != hw

    kernel = functools.partial(_dice_partial_kernel, tile_hw=tile_hw, hw=hw,
                               n_hw=n_hw, needs_mask=needs_mask)

    def in_map(p, h):
        blk = p * n_hw + h
        if needs_mask:
            blk = jnp.minimum(blk, n_tiles - 1)   # never DMA past the array
        return (0, blk)

    cost = pl.CostEstimate(
        flops=4 * rows * hw,
        transcendentals=0,
        bytes_accessed=(x.size * x.dtype.itemsize + t.size * t.dtype.itemsize
                        + n_par * rows * 2 * 4),
    )

    partial_sums = pl.pallas_call(
        kernel,
        out_shape=jax.ShapeDtypeStruct((n_par, rows, 2), jnp.float32),
        grid_spec=pltpu.PrefetchScalarGridSpec(
            num_scalar_prefetch=0,
            grid=(n_par, n_hw),
            in_specs=[
                pl.BlockSpec((rows, tile_hw), in_map),   # predictions
                pl.BlockSpec((rows, tile_hw), in_map),   # targets
            ],
            out_specs=pl.BlockSpec((1, rows, 2), lambda p, h: (p, 0, 0)),
            scratch_shapes=[
                pltpu.VMEM((rows, 1), jnp.float32),      # inter accumulator
                pltpu.VMEM((rows, 1), jnp.float32),      # x+t accumulator
            ],
        ),
        compiler_params=pltpu.CompilerParams(
            dimension_semantics=("parallel", "arbitrary"),
            vmem_limit_bytes=_VMEM_LIMIT_BYTES,
        ),
        cost_estimate=cost,
    )(x, t)

    # Tiny finalize in the wrapper: combine the parallel partials, per-(n,c)
    # dice, mean over N, weighted sum over classes (matches the PyTorch loop).
    parts = jnp.sum(partial_sums, axis=0)                 # (rows, 2)
    inter = parts[:, 0].reshape(N, C)
    sums = parts[:, 1].reshape(N, C)
    smooth = jnp.float32(1.0)
    dice = 2.0 * (inter + smooth) / (sums + smooth)       # (N, C)
    per_class = 1.0 - jnp.sum(dice, axis=0) / jnp.float32(N)
    return jnp.sum(per_class * weights.astype(jnp.float32))


def _reference(inputs, targets, weights):
    # Pure-JAX reference matching the PyTorch module exactly.
    N = inputs.shape[0]
    smooth = 1.0
    total = 0.0
    for i in range(inputs.shape[1]):
        xf = inputs[:, i].reshape(N, -1).astype(jnp.float32)
        tf = targets[:, i].reshape(N, -1).astype(jnp.float32)
        inter = jnp.sum(xf * tf, axis=1)
        dice = 2.0 * (inter + smooth) / (jnp.sum(xf, 1) + jnp.sum(tf, 1) + smooth)
        total = total + (1.0 - jnp.sum(dice) / N) * weights[i]
    return total


def _make_case(key, N, C, H, W):
    k1, k2 = jax.random.split(key)
    inputs = jax.nn.softmax(jax.random.normal(k1, (N, C, H, W), jnp.float32), axis=1)
    labels = jax.random.randint(k2, (N, H, W), 0, C)
    targets = jax.nn.one_hot(labels, C, dtype=jnp.float32).transpose(0, 3, 1, 2)
    weights = jnp.ones((C,), jnp.float32)
    return inputs, targets, weights


if __name__ == "__main__":
    key = jax.random.PRNGKey(0)
    k1, k2, k3 = jax.random.split(key, 3)

    # 1) Default path (single full-extent tile).
    inputs, targets, weights = _make_case(k1, 2, 4, 16, 16)
    loss = jax.block_until_ready(multiclass_dice_loss(inputs, targets, weights))
    ref = _reference(inputs, targets, weights)
    assert jnp.allclose(loss, ref, atol=1e-5, rtol=1e-5), (loss, ref)

    # 2) Forced multi-tile + 2-way parallel HW split + tail masking (HW=255).
    inputs2, targets2, weights2 = _make_case(k2, 2, 4, 15, 17)
    loss2 = jax.block_until_ready(
        multiclass_dice_loss(inputs2, targets2, weights2, target_block_bytes=4096))
    ref2 = _reference(inputs2, targets2, weights2)
    assert jnp.allclose(loss2, ref2, atol=1e-5, rtol=1e-5), (loss2, ref2)

    # 3) Odd tile count (exercises the clamped, fully-masked extra tile), rows=6.
    inputs3, targets3, weights3 = _make_case(k3, 2, 3, 16, 24)
    loss3 = jax.block_until_ready(
        multiclass_dice_loss(inputs3, targets3, weights3, target_block_bytes=3072))
    ref3 = _reference(inputs3, targets3, weights3)
    assert jnp.allclose(loss3, ref3, atol=1e-5, rtol=1e-5), (loss3, ref3)

    print("KERNEL_OK")
</pallas_src>

<mosaic_0001>
module attributes {stable_mosaic.version = 11 : i64} {
  func.func @_dice_partial_kernel(%arg0: i32, %arg1: i32, %arg2: memref<8x256xf32, #tpu.memory_space<vmem>>, %arg3: memref<8x256xf32, #tpu.memory_space<vmem>>, %arg4: memref<1x8x2xf32, #tpu.memory_space<vmem>>, %arg5: memref<8x1xf32, #tpu.memory_space<vmem>>, %arg6: memref<8x1xf32, #tpu.memory_space<vmem>>) attributes {dimension_semantics = [#tpu.dimension_semantics<parallel>, #tpu.dimension_semantics<arbitrary>], iteration_bounds = array<i64: 1, 1>, scalar_prefetch = 0 : i64, scratch_operands = 2 : i64, tpu.core_type = #tpu.core_type<tc>, window_params = [{transform_indices = @transform_0, window_bounds = array<i64: 8, 256>}, {transform_indices = @transform_1, window_bounds = array<i64: 8, 256>}, {transform_indices = @transform_2, window_bounds = array<i64: 1, 8, 2>}]} {
    %c0_i32 = arith.constant 0 : i32
    %0 = arith.cmpi eq, %arg1, %c0_i32 : i32
    %1 = arith.extui %0 : i1 to i32
    %c0_i32_0 = arith.constant 0 : i32
    %2 = arith.cmpi ne, %1, %c0_i32_0 : i32
    scf.if %2 {
      %cst_15 = arith.constant 0.000000e+00 : f32
      %20 = vector.broadcast %cst_15 : f32 to vector<8x1xf32>
      %c0_16 = arith.constant 0 : index
      %c0_17 = arith.constant 0 : index
      %21 = vector.load %arg5[%c0_16, %c0_17] : memref<8x1xf32, #tpu.memory_space<vmem>>, vector<8x1xf32>
      tpu.vector_store %arg5[%c0_16, %c0_17], %20 {strides = array<i32>} : memref<8x1xf32, #tpu.memory_space<vmem>>, vector<8x1xf32>,
      %cst_18 = arith.constant 0.000000e+00 : f32
      %22 = vector.broadcast %cst_18 : f32 to vector<8x1xf32>
      %c0_19 = arith.constant 0 : index
      %c0_20 = arith.constant 0 : index
      %23 = vector.load %arg6[%c0_19, %c0_20] : memref<8x1xf32, #tpu.memory_space<vmem>>, vector<8x1xf32>
      tpu.vector_store %arg6[%c0_19, %c0_20], %22 {strides = array<i32>} : memref<8x1xf32, #tpu.memory_space<vmem>>, vector<8x1xf32>,
    } else {
    }
    %c0 = arith.constant 0 : index
    %c0_1 = arith.constant 0 : index
    %3 = vector.load %arg2[%c0, %c0_1] : memref<8x256xf32, #tpu.memory_space<vmem>>, vector<8x256xf32>
    %c0_2 = arith.constant 0 : index
    %c0_3 = arith.constant 0 : index
    %4 = vector.load %arg3[%c0_2, %c0_3] : memref<8x256xf32, #tpu.memory_space<vmem>>, vector<8x256xf32>
    %c0_4 = arith.constant 0 : index
    %c0_5 = arith.constant 0 : index
    %5 = vector.load %arg5[%c0_4, %c0_5] : memref<8x1xf32, #tpu.memory_space<vmem>>, vector<8x1xf32>
    %6 = arith.mulf %3, %4 : vector<8x256xf32>
    %cst = arith.constant dense<0.000000e+00> : vector<8xf32>
    %7 = vector.multi_reduction <add>, %6, %cst [1] : vector<8x256xf32> to vector<8xf32>
    %8 = vector.shape_cast %7 : vector<8xf32> to vector<8x1xf32>
    %9 = arith.addf %5, %8 : vector<8x1xf32>
    %c0_6 = arith.constant 0 : index
    %c0_7 = arith.constant 0 : index
    %10 = vector.load %arg5[%c0_6, %c0_7] : memref<8x1xf32, #tpu.memory_space<vmem>>, vector<8x1xf32>
    tpu.vector_store %arg5[%c0_6, %c0_7], %9 {strides = array<i32>} : memref<8x1xf32, #tpu.memory_space<vmem>>, vector<8x1xf32>,
    %c0_8 = arith.constant 0 : index
    %c0_9 = arith.constant 0 : index
    %11 = vector.load %arg6[%c0_8, %c0_9] : memref<8x1xf32, #tpu.memory_space<vmem>>, vector<8x1xf32>
    %12 = arith.addf %3, %4 : vector<8x256xf32>
    %cst_10 = arith.constant dense<0.000000e+00> : vector<8xf32>
    %13 = vector.multi_reduction <add>, %12, %cst_10 [1] : vector<8x256xf32> to vector<8xf32>
    %14 = vector.shape_cast %13 : vector<8xf32> to vector<8x1xf32>
    %15 = arith.addf %11, %14 : vector<8x1xf32>
    %c0_11 = arith.constant 0 : index
    %c0_12 = arith.constant 0 : index
    %16 = vector.load %arg6[%c0_11, %c0_12] : memref<8x1xf32, #tpu.memory_space<vmem>>, vector<8x1xf32>
    tpu.vector_store %arg6[%c0_11, %c0_12], %15 {strides = array<i32>} : memref<8x1xf32, #tpu.memory_space<vmem>>, vector<8x1xf32>,
    %c0_i32_13 = arith.constant 0 : i32
    %17 = arith.cmpi eq, %arg1, %c0_i32_13 : i32
    %18 = arith.extui %17 : i1 to i32
    %c0_i32_14 = arith.constant 0 : i32
    %19 = arith.cmpi ne, %18, %c0_i32_14 : i32
    scf.if %19 {
      %c0_15 = arith.constant 0 : index
      %c0_16 = arith.constant 0 : index
      %20 = vector.load %arg5[%c0_15, %c0_16] : memref<8x1xf32, #tpu.memory_space<vmem>>, vector<8x1xf32>
      %c0_17 = arith.constant 0 : index
      %c0_18 = arith.constant 0 : index
      %c0_19 = arith.constant 0 : index
      %21 = vector.load %arg4[%c0_17, %c0_18, %c0_19] : memref<1x8x2xf32, #tpu.memory_space<vmem>>, vector<1x8x1xf32>
      %22 = vector.shape_cast %21 : vector<1x8x1xf32> to vector<8x1xf32>
      %23 = vector.shape_cast %20 : vector<8x1xf32> to vector<1x8x1xf32>
      tpu.vector_store %arg4[%c0_17, %c0_18, %c0_19], %23 {strides = array<i32>} : memref<1x8x2xf32, #tpu.memory_space<vmem>>, vector<1x8x1xf32>,
      %c0_20 = arith.constant 0 : index
      %c0_21 = arith.constant 0 : index
      %24 = vector.load %arg6[%c0_20, %c0_21] : memref<8x1xf32, #tpu.memory_space<vmem>>, vector<8x1xf32>
      %c0_22 = arith.constant 0 : index
      %c0_23 = arith.constant 0 : index
      %c1 = arith.constant 1 : index
      %25 = vector.load %arg4[%c0_22, %c0_23, %c1] : memref<1x8x2xf32, #tpu.memory_space<vmem>>, vector<1x8x1xf32>
      %26 = vector.shape_cast %25 : vector<1x8x1xf32> to vector<8x1xf32>
      %27 = vector.shape_cast %24 : vector<8x1xf32> to vector<1x8x1xf32>
      tpu.vector_store %arg4[%c0_22, %c0_23, %c1], %27 {strides = array<i32>} : memref<1x8x2xf32, #tpu.memory_space<vmem>>, vector<1x8x1xf32>,
    } else {
    }
    return
  }
  func.func @transform_0(%arg0: i32, %arg1: i32) -> (i32, i32) {
    %c1_i32 = arith.constant 1 : i32
    %0 = arith.muli %arg0, %c1_i32 : i32
    %1 = arith.addi %0, %arg1 : i32
    %c0_i32 = arith.constant 0 : i32
    %c0_i32_0 = arith.constant 0 : i32
    return %c0_i32, %1 : i32, i32
  }
  func.func @transform_1(%arg0: i32, %arg1: i32) -> (i32, i32) {
    %c1_i32 = arith.constant 1 : i32
    %0 = arith.muli %arg0, %c1_i32 : i32
    %1 = arith.addi %0, %arg1 : i32
    %c0_i32 = arith.constant 0 : i32
    %c0_i32_0 = arith.constant 0 : i32
    return %c0_i32, %1 : i32, i32
  }
  func.func @transform_2(%arg0: i32, %arg1: i32) -> (i32, i32, i32) {
    %c0_i32 = arith.constant 0 : i32
    %c0_i32_0 = arith.constant 0 : i32
    %c0_i32_1 = arith.constant 0 : i32
    return %arg0, %c0_i32, %c0_i32_0 : i32, i32, i32
  }
}

</mosaic_0001>

<llo_original>
// kernel: tpu_custom_call.1
$region0: #{tpu_custom_call.1}
  #allocation0 [shape = 'u32[]', space=smem, size = 0x4, offset = 0x4, fixed_abs, tag = 'smem constant byte address 0x4 - core index']
  #allocation1 [shape = 'u32[144,128]{1,0:T(1,128)}', space=vmem, size = 0x12000, scoped, tag = 'internal scratch']
  #allocation2 [shape = 'f32[8,1]{1,0:T(8,128)}', space=vmem, size = 0x1000, scoped, tag = 'scratch operand']
  #allocation3 [shape = 'f32[8,1]{1,0:T(8,128)}', space=vmem, size = 0x1000, scoped, tag = 'scratch operand']
  %s0 = inlined_call_operand.hbm [shape: f32[8,256], index: 0, kind: input, shape index: {}]
  %s1 = inlined_call_operand.hbm [shape: f32[8,256], index: 1, kind: input, shape index: {}]
  %s2 = inlined_call_operand.vmem [shape: f32[1,8,2], index: 2, kind: output, shape index: {}]
  %s3 = sld [smem:[#allocation0]]
  $region34: #{tpu_custom_call.1} parent=0
    _
  %s5 = ssub.s32 1, %s3
  %s6 = scalar_select 0, %s5, %s3
  $region1: #{tpu_custom_call.1} parent=0
    #allocation4 [shape = 'u8[8192]{0}', space=vmem, size = 0x2000, scoped, tag = 'input window, operand 0, single buffered']
    #allocation5 [shape = 's32[1]{0}', space=sflag, size = 0x4, scoped, tag = 'scoped memory for tpu_custom_call.1']
    #allocation6 [shape = 'u8[8192]{0}', space=vmem, size = 0x2000, scoped, tag = 'input window, operand 1, single buffered']
    #allocation7 [shape = 's32[1]{0}', space=sflag, size = 0x4, scoped, tag = 'scoped memory for tpu_custom_call.1']
    %7 = vsyncpa [#allocation5], 0
    %8 = vsyncpa [#allocation7], 0
    // Predicated region
    $region2: #{tpu_custom_call.1} parent=1 // pred_check
      _
    $region3: #{tpu_custom_call.1} parent=1 // pred_check_branch
      %10 = sbr.rel (0) target = $region5
    $region4: #{tpu_custom_call.1} parent=1 // pred_region
      %s11 = sadd.s32 0, 0
      %s12 = smul.u32 2, %s11
      %s14 = ssub.s32 256, 256
      %15 = vsyncadd [#allocation5], %s14
      %s16 = smul.addr %s12, 128
      %s17 = scalar_lea.hbm %s0, %s16
      %s19 = sshll.u32 [#allocation4], 4
      %s20 = int_to_ptr.vmem [resolvable:$true] %s19
      %22 = dma.hbm_to_vmem [thread:$0]  %s17, 256, %s20, [#allocation5]
    $region5: #{tpu_custom_call.1} parent=1 // pred_fallthru
      _
    // Predicated region
    $region6: #{tpu_custom_call.1} parent=1 // pred_check
      _
    $region7: #{tpu_custom_call.1} parent=1 // pred_check_branch
      %24 = sbr.rel (0) target = $region9
    $region8: #{tpu_custom_call.1} parent=1 // pred_region
      %s25 = sadd.s32 0, 0
      %s26 = smul.u32 2, %s25
      %s28 = ssub.s32 256, 256
      %29 = vsyncadd [#allocation7], %s28
      %s30 = smul.addr %s26, 128
      %s31 = scalar_lea.hbm %s1, %s30
      %s33 = sshll.u32 [#allocation6], 4
      %s34 = int_to_ptr.vmem [resolvable:$true] %s33
      %36 = dma.hbm_to_vmem [thread:$0]  %s31, 256, %s34, [#allocation7]
    $region9: #{tpu_custom_call.1} parent=1 // pred_fallthru
      _
    // Predicated region
    $region10: #{tpu_custom_call.1} parent=1 // pred_check
      _
    $region11: #{tpu_custom_call.1} parent=1 // pred_check_branch
      %38 = sbr.rel (0) target = $region13
    $region12: #{tpu_custom_call.1} parent=1 // pred_region
      %39 = dma.done [#allocation5], 256
    $region13: #{tpu_custom_call.1} parent=1 // pred_fallthru
      _
    // Predicated region
    $region14: #{tpu_custom_call.1} parent=1 // pred_check
      _
    $region15: #{tpu_custom_call.1} parent=1 // pred_check_branch
      %41 = sbr.rel (0) target = $region17
    $region16: #{tpu_custom_call.1} parent=1 // pred_region
      %42 = dma.done [#allocation7], 256
    $region17: #{tpu_custom_call.1} parent=1 // pred_fallthru
      _
    %s43 = sadd.s32 0, 0
    %s44 = smul.u32 2, %s43
    %s45 = sadd.s32 0, 0
    %s46 = smul.u32 2, %s45
    %p47 = scmp.eq.s32.totalorder 0, 0
    // Predicated region
    $region18: #{tpu_custom_call.1} parent=1 // pred_check
      %p48 = pneg %p47
    $region19: #{tpu_custom_call.1} parent=1 // pred_check_branch
      %50 = sbr.rel (%p48) target = $region21
    $region20: #{tpu_custom_call.1} parent=1 // pred_region
      %vm51 = vcmask 7168
      %52 = vst.msk [vmem:[#allocation2] sm:$0xff] %vm51, 0.0
      %53 = vst.msk [vmem:[#allocation3] sm:$0xff] %vm51, 0.0
    $region21: #{tpu_custom_call.1} parent=1 // pred_fallthru
      _
    %v54 = vld [vmem:[#allocation4] sm:$0xff]
    %v55 = vld [vmem:[#allocation4 + $0x8] sm:$0xff]
    %v56 = vld [vmem:[#allocation6] sm:$0xff]
    %v57 = vld [vmem:[#allocation6 + $0x8] sm:$0xff]
    %v58 = vld [vmem:[#allocation2] sm:$0xff]
    %v59 = vmul.f32 %v54, %v56
    %v60 = vmul.f32 %v55, %v57
    %v61 = vadd.f32 %v59, %v60
    %62 = vadd.xlane.f32.xlu0 %v61
    %v63 = vpop.xlane.xlu0 %62
    %v64 = vadd.f32 %v58, %v63
    %vm65 = vcmask 7168
    %66 = vst.msk [vmem:[#allocation2] sm:$0xff] %vm65, %v64
    %v67 = vld [vmem:[#allocation3] sm:$0xff]
    %v68 = vadd.f32 %v54, %v56
    %v69 = vadd.f32 %v55, %v57
    %v70 = vadd.f32 %v68, %v69
    %71 = vadd.xlane.f32.xlu0 %v70
    %v72 = vpop.xlane.xlu0 %71
    %v73 = vadd.f32 %v67, %v72
    %74 = vst.msk [vmem:[#allocation3] sm:$0xff] %vm65, %v73
    // Predicated region
    $region22: #{tpu_custom_call.1} parent=1 // pred_check
      %p75 = pneg %p47
    $region23: #{tpu_custom_call.1} parent=1 // pred_check_branch
      %77 = sbr.rel (%p75) target = $region25
    $region24: #{tpu_custom_call.1} parent=1 // pred_region
      %v78 = vld [vmem:[#allocation2] sm:$0xff]
      %79 = vst.msk [vmem:[%s2] sm:$0xff] %vm65, %v78
      %v80 = vld [vmem:[#allocation3] sm:$0xff]
      %82 = vrot.lane.b32.xlu0 %v80, 1
      %v83 = vpop.permute.xlu0 %82
      %vm85 = vcmask 15368
      %86 = vst.msk [vmem:[%s2] sm:$0xff] %vm85, %v83
    $region25: #{tpu_custom_call.1} parent=1 // pred_fallthru
      _
    // Predicated region
    $region26: #{tpu_custom_call.1} parent=1 // pred_check
      _
    $region27: #{tpu_custom_call.1} parent=1 // pred_check_branch
      %88 = sbr.rel (0) target = $region29
    $region28: #{tpu_custom_call.1} parent=1 // pred_region
      _
    $region29: #{tpu_custom_call.1} parent=1 // pred_fallthru
      _
    // Predicated region
    $region30: #{tpu_custom_call.1} parent=1 // pred_check
      _
    $region31: #{tpu_custom_call.1} parent=1 // pred_check_branch
      %90 = sbr.rel (0) target = $region33
    $region32: #{tpu_custom_call.1} parent=1 // pred_region
      _
    $region33: #{tpu_custom_call.1} parent=1 // pred_fallthru
      _
    %91 = vsyncpa [#allocation5], 1
    %92 = vsyncpa [#allocation7], 1

</llo_original>
